<compile_context>
chip_gen: v5e
topology: v5e:2x2
jax: 0.10.0
libtpu: 0.0.40
codegen_flags: <defaults>
</compile_context>

<pallas_src>
import functools

import numpy as np
import jax
import jax.numpy as jnp
from jax import lax
from jax.experimental import pallas as pl
from jax.experimental.pallas import tpu as pltpu


def attention_kernel(x_ref, wq_ref, wk_ref, wv_ref, wo_ref, bo_ref, out_ref,
                     *, scale):
    """One (batch, head) grid step of multi-head self-attention.

    x_ref  : (N, D)   input tokens for this batch element (resident across heads)
    wq_ref : (D, dh)  per-head query projection
    wk_ref : (D, dh)  per-head key projection
    wv_ref : (D, dh)  per-head value projection
    wo_ref : (dh, D)  per-head slice of the output projection
    bo_ref : (1, D)   output-projection bias
    out_ref: (N, D)   accumulated over the head grid axis
    """
    h = pl.program_id(1)

    x = x_ref[...]                                                   # (N, D)

    # Per-head projections: (N, D) x (D, dh) -> (N, dh), K = D (deep).
    q = jnp.dot(x, wq_ref[...], preferred_element_type=jnp.float32)
    k = jnp.dot(x, wk_ref[...], preferred_element_type=jnp.float32)
    v = jnp.dot(x, wv_ref[...], preferred_element_type=jnp.float32)

    # Scaled dot-product: contract the head dim of q and k directly (NT
    # matmul), avoiding an explicit transpose.  Result (N, N) is lane-dense.
    dots = lax.dot_general(q, k, (((1,), (1,)), ((), ())),
                           preferred_element_type=jnp.float32) * scale

    # Numerically stable softmax along the key axis.
    m = jnp.max(dots, axis=-1, keepdims=True)
    p = jnp.exp(dots - m)
    attn = p / jnp.sum(p, axis=-1, keepdims=True)

    # Attention-weighted values: (N, N) x (N, dh) -> (N, dh), K = N (deep).
    o = jnp.dot(attn, v, preferred_element_type=jnp.float32)

    # This head's contribution to the output projection: (N, dh) x (dh, D).
    contrib = jnp.dot(o, wo_ref[...], preferred_element_type=jnp.float32)

    @pl.when(h == 0)
    def _init():
        out_ref[...] = contrib + bo_ref[...]                         # bias once

    @pl.when(h > 0)
    def _accum():
        out_ref[...] += contrib

    # TODO(synk): the optional `mask` / `maps` arguments of the PyTorch module
    # (boolean masking of `dots` before softmax, with the K*K view reshape)
    # are not implemented; only the default mask=None, maps=None path is.
    # Dropout(p=0.0) in to_out is the identity at inference and is omitted.


def attention(x, w_qkv, w_out, b_out, heads):
    """Pallas multi-head attention.  x: (B, N, D) f32.  Returns (B, N, D) f32.

    w_qkv : (D, 3*D)  columns ordered [q | k | v], each head-major (h, d)
            (i.e. the transpose of the PyTorch to_qkv weight).
    w_out : (D, D)    rows ordered (h, d) (transpose of the PyTorch to_out weight).
    b_out : (D,)      output bias.
    """
    B, N, D = x.shape
    assert D % heads == 0
    dh = D // heads
    scale = float(D) ** (-0.5)

    # One-time layout plumbing: per-head weight tiles so the kernel needs no
    # lane-slicing or transposes.
    wq = jnp.transpose(w_qkv[:, 0 * D:1 * D].reshape(D, heads, dh), (1, 0, 2))  # (H, D, dh)
    wk = jnp.transpose(w_qkv[:, 1 * D:2 * D].reshape(D, heads, dh), (1, 0, 2))  # (H, D, dh)
    wv = jnp.transpose(w_qkv[:, 2 * D:3 * D].reshape(D, heads, dh), (1, 0, 2))  # (H, D, dh)
    wo = w_out.reshape(heads, dh, D)                                            # (H, dh, D)
    bo = b_out.reshape(1, D)

    kernel = functools.partial(attention_kernel, scale=scale)

    return pl.pallas_call(
        kernel,
        out_shape=jax.ShapeDtypeStruct((B, N, D), jnp.float32),
        grid_spec=pltpu.PrefetchScalarGridSpec(
            num_scalar_prefetch=0,
            grid=(B, heads),
            in_specs=[
                pl.BlockSpec((None, N, D), lambda b, h: (b, 0, 0)),   # x (resident across h)
                pl.BlockSpec((None, D, dh), lambda b, h: (h, 0, 0)),  # wq head tile
                pl.BlockSpec((None, D, dh), lambda b, h: (h, 0, 0)),  # wk head tile
                pl.BlockSpec((None, D, dh), lambda b, h: (h, 0, 0)),  # wv head tile
                pl.BlockSpec((None, dh, D), lambda b, h: (h, 0, 0)),  # wo head tile
                pl.BlockSpec((1, D), lambda b, h: (0, 0)),            # bias
            ],
            out_specs=pl.BlockSpec((None, N, D), lambda b, h: (b, 0, 0)),
        ),
        compiler_params=pltpu.CompilerParams(
            dimension_semantics=("parallel", "arbitrary")),
    )(x, wq, wk, wv, wo, bo)


def attention_ref(x, w_qkv, w_out, b_out, heads):
    """Pure-JAX reference (same math as the PyTorch module, default path)."""
    B, N, D = x.shape
    dh = D // heads
    scale = float(D) ** (-0.5)
    hi = lax.Precision.HIGHEST

    qkv = jnp.einsum('bnd,de->bne', x, w_qkv, precision=hi)          # (B, N, 3D)
    q, k, v = jnp.split(qkv, 3, axis=-1)

    def to_heads(t):
        return jnp.transpose(t.reshape(B, N, heads, dh), (0, 2, 1, 3))

    q, k, v = to_heads(q), to_heads(k), to_heads(v)
    dots = jnp.einsum('bhid,bhjd->bhij', q, k, precision=hi) * scale
    attn = jax.nn.softmax(dots, axis=-1)
    o = jnp.einsum('bhij,bhjd->bhid', attn, v, precision=hi)
    o = jnp.transpose(o, (0, 2, 1, 3)).reshape(B, N, D)
    return jnp.einsum('bnd,de->bne', o, w_out, precision=hi) + b_out.reshape(1, 1, D)


if __name__ == "__main__":
    # Small shapes consistent with the module: heads=8, dim divisible by heads.
    B, N, D, H = 2, 128, 128, 8

    key = jax.random.PRNGKey(0)
    kx, kqkv, kwo, kbo = jax.random.split(key, 4)
    x = jax.random.normal(kx, (B, N, D), jnp.float32)
    # Weights in JAX (in, out) layout == transpose of the PyTorch Linear weights.
    w_qkv = jax.random.normal(kqkv, (D, 3 * D), jnp.float32) / np.sqrt(D)
    w_out = jax.random.normal(kwo, (D, D), jnp.float32) / np.sqrt(D)
    b_out = jax.random.normal(kbo, (D,), jnp.float32) * 0.01

    out = jax.block_until_ready(attention(x, w_qkv, w_out, b_out, heads=H))
    assert out.shape == (B, N, D) and out.dtype == jnp.float32

    ref = jax.block_until_ready(attention_ref(x, w_qkv, w_out, b_out, heads=H))
    # Documented tolerance: kernel matmuls use default MXU precision, the
    # reference uses HIGHEST (see precision note at top of file).
    np.testing.assert_allclose(np.asarray(out), np.asarray(ref),
                               rtol=2e-2, atol=2e-2)
    print("KERNEL_OK")
</pallas_src>

<mosaic_0001>
module attributes {stable_mosaic.version = 11 : i64} {
  func.func @attention_kernel(%arg0: i32, %arg1: i32, %arg2: memref<1x128x128xf32, #tpu.memory_space<vmem>>, %arg3: memref<1x128x16xf32, #tpu.memory_space<vmem>>, %arg4: memref<1x128x16xf32, #tpu.memory_space<vmem>>, %arg5: memref<1x128x16xf32, #tpu.memory_space<vmem>>, %arg6: memref<1x16x128xf32, #tpu.memory_space<vmem>>, %arg7: memref<1x128xf32, #tpu.memory_space<vmem>>, %arg8: memref<1x128x128xf32, #tpu.memory_space<vmem>>) attributes {dimension_semantics = [#tpu.dimension_semantics<parallel>, #tpu.dimension_semantics<arbitrary>], iteration_bounds = array<i64: 2, 8>, scalar_prefetch = 0 : i64, scratch_operands = 0 : i64, tpu.core_type = #tpu.core_type<tc>, window_params = [{transform_indices = @transform_0, window_bounds = array<i64: 1, 128, 128>}, {transform_indices = @transform_1, window_bounds = array<i64: 1, 128, 16>}, {transform_indices = @transform_2, window_bounds = array<i64: 1, 128, 16>}, {transform_indices = @transform_3, window_bounds = array<i64: 1, 128, 16>}, {transform_indices = @transform_4, window_bounds = array<i64: 1, 16, 128>}, {pipeline_mode = #tpu.pipeline_mode<synchronous>, transform_indices = @transform_5, window_bounds = array<i64: 1, 128>}, {transform_indices = @transform_6, window_bounds = array<i64: 1, 128, 128>}]} {
    %c0 = arith.constant 0 : index
    %c0_0 = arith.constant 0 : index
    %c0_1 = arith.constant 0 : index
    %0 = vector.load %arg2[%c0, %c0_0, %c0_1] : memref<1x128x128xf32, #tpu.memory_space<vmem>>, vector<1x128x128xf32>
    %1 = vector.shape_cast %0 : vector<1x128x128xf32> to vector<128x128xf32>
    %c0_2 = arith.constant 0 : index
    %c0_3 = arith.constant 0 : index
    %c0_4 = arith.constant 0 : index
    %2 = vector.load %arg3[%c0_2, %c0_3, %c0_4] : memref<1x128x16xf32, #tpu.memory_space<vmem>>, vector<1x128x16xf32>
    %3 = vector.shape_cast %2 : vector<1x128x16xf32> to vector<128x16xf32>
    %cst = arith.constant dense<0.000000e+00> : vector<128x16xf32>
    %4 = tpu.matmul %1, %3, %cst {dimension_numbers = #tpu.dot_dimension_numbers<[1], [0], [0], [1], [0, 0, 1, 1], [], []>} : vector<128x128xf32>, vector<128x16xf32>, vector<128x16xf32> -> vector<128x16xf32>
    %c0_5 = arith.constant 0 : index
    %c0_6 = arith.constant 0 : index
    %c0_7 = arith.constant 0 : index
    %5 = vector.load %arg4[%c0_5, %c0_6, %c0_7] : memref<1x128x16xf32, #tpu.memory_space<vmem>>, vector<1x128x16xf32>
    %6 = vector.shape_cast %5 : vector<1x128x16xf32> to vector<128x16xf32>
    %cst_8 = arith.constant dense<0.000000e+00> : vector<128x16xf32>
    %7 = tpu.matmul %1, %6, %cst_8 {dimension_numbers = #tpu.dot_dimension_numbers<[1], [0], [0], [1], [0, 0, 1, 1], [], []>} : vector<128x128xf32>, vector<128x16xf32>, vector<128x16xf32> -> vector<128x16xf32>
    %c0_9 = arith.constant 0 : index
    %c0_10 = arith.constant 0 : index
    %c0_11 = arith.constant 0 : index
    %8 = vector.load %arg5[%c0_9, %c0_10, %c0_11] : memref<1x128x16xf32, #tpu.memory_space<vmem>>, vector<1x128x16xf32>
    %9 = vector.shape_cast %8 : vector<1x128x16xf32> to vector<128x16xf32>
    %cst_12 = arith.constant dense<0.000000e+00> : vector<128x16xf32>
    %10 = tpu.matmul %1, %9, %cst_12 {dimension_numbers = #tpu.dot_dimension_numbers<[1], [0], [0], [1], [0, 0, 1, 1], [], []>} : vector<128x128xf32>, vector<128x16xf32>, vector<128x16xf32> -> vector<128x16xf32>
    %cst_13 = arith.constant dense<0.000000e+00> : vector<128x128xf32>
    %11 = tpu.matmul %4, %7, %cst_13 {dimension_numbers = #tpu.dot_dimension_numbers<[1], [1], [0], [0], [0, 0, 1, 0], [], []>} : vector<128x16xf32>, vector<128x16xf32>, vector<128x128xf32> -> vector<128x128xf32>
    %cst_14 = arith.constant 0.0883883461 : f32
    %12 = vector.broadcast %cst_14 : f32 to vector<128x128xf32>
    %13 = arith.mulf %11, %12 : vector<128x128xf32>
    %cst_15 = arith.constant dense<0xFF800000> : vector<128xf32>
    %14 = vector.multi_reduction <maximumf>, %13, %cst_15 [1] : vector<128x128xf32> to vector<128xf32>
    %15 = vector.shape_cast %14 : vector<128xf32> to vector<128x1xf32>
    %16 = vector.broadcast %15 : vector<128x1xf32> to vector<128x128xf32>
    %17 = arith.subf %13, %16 : vector<128x128xf32>
    %18 = math.exp %17 : vector<128x128xf32>
    %cst_16 = arith.constant dense<0.000000e+00> : vector<128xf32>
    %19 = vector.multi_reduction <add>, %18, %cst_16 [1] : vector<128x128xf32> to vector<128xf32>
    %20 = vector.shape_cast %19 : vector<128xf32> to vector<128x1xf32>
    %21 = vector.broadcast %20 : vector<128x1xf32> to vector<128x128xf32>
    %22 = arith.divf %18, %21 : vector<128x128xf32>
    %cst_17 = arith.constant dense<0.000000e+00> : vector<128x16xf32>
    %23 = tpu.matmul %22, %10, %cst_17 {dimension_numbers = #tpu.dot_dimension_numbers<[1], [0], [0], [1], [0, 0, 1, 1], [], []>} : vector<128x128xf32>, vector<128x16xf32>, vector<128x16xf32> -> vector<128x16xf32>
    %c0_18 = arith.constant 0 : index
    %c0_19 = arith.constant 0 : index
    %c0_20 = arith.constant 0 : index
    %24 = vector.load %arg6[%c0_18, %c0_19, %c0_20] : memref<1x16x128xf32, #tpu.memory_space<vmem>>, vector<1x16x128xf32>
    %25 = vector.shape_cast %24 : vector<1x16x128xf32> to vector<16x128xf32>
    %cst_21 = arith.constant dense<0.000000e+00> : vector<128x128xf32>
    %26 = tpu.matmul %23, %25, %cst_21 {dimension_numbers = #tpu.dot_dimension_numbers<[1], [0], [0], [1], [0, 0, 1, 1], [], []>} : vector<128x16xf32>, vector<16x128xf32>, vector<128x128xf32> -> vector<128x128xf32>
    %c0_i32 = arith.constant 0 : i32
    %27 = arith.cmpi eq, %arg1, %c0_i32 : i32
    %28 = arith.extui %27 : i1 to i32
    %c0_i32_22 = arith.constant 0 : i32
    %29 = arith.cmpi ne, %28, %c0_i32_22 : i32
    scf.if %29 {
      %c0_25 = arith.constant 0 : index
      %c0_26 = arith.constant 0 : index
      %33 = vector.load %arg7[%c0_25, %c0_26] : memref<1x128xf32, #tpu.memory_space<vmem>>, vector<1x128xf32>
      %34 = vector.broadcast %33 : vector<1x128xf32> to vector<128x128xf32>
      %35 = arith.addf %26, %34 : vector<128x128xf32>
      %c0_27 = arith.constant 0 : index
      %c0_28 = arith.constant 0 : index
      %c0_29 = arith.constant 0 : index
      %36 = vector.load %arg8[%c0_27, %c0_28, %c0_29] : memref<1x128x128xf32, #tpu.memory_space<vmem>>, vector<1x128x128xf32>
      %37 = vector.shape_cast %36 : vector<1x128x128xf32> to vector<128x128xf32>
      %38 = vector.shape_cast %35 : vector<128x128xf32> to vector<1x128x128xf32>
      tpu.vector_store %arg8[%c0_27, %c0_28, %c0_29], %38 {strides = array<i32>} : memref<1x128x128xf32, #tpu.memory_space<vmem>>, vector<1x128x128xf32>,
    } else {
    }
    %c0_i32_23 = arith.constant 0 : i32
    %30 = arith.cmpi sgt, %arg1, %c0_i32_23 : i32
    %31 = arith.extui %30 : i1 to i32
    %c0_i32_24 = arith.constant 0 : i32
    %32 = arith.cmpi ne, %31, %c0_i32_24 : i32
    scf.if %32 {
      %c0_25 = arith.constant 0 : index
      %c0_26 = arith.constant 0 : index
      %c0_27 = arith.constant 0 : index
      %33 = vector.load %arg8[%c0_25, %c0_26, %c0_27] : memref<1x128x128xf32, #tpu.memory_space<vmem>>, vector<1x128x128xf32>
      %34 = vector.shape_cast %33 : vector<1x128x128xf32> to vector<128x128xf32>
      %35 = arith.addf %34, %26 : vector<128x128xf32>
      %c0_28 = arith.constant 0 : index
      %c0_29 = arith.constant 0 : index
      %c0_30 = arith.constant 0 : index
      %36 = vector.load %arg8[%c0_28, %c0_29, %c0_30] : memref<1x128x128xf32, #tpu.memory_space<vmem>>, vector<1x128x128xf32>
      %37 = vector.shape_cast %36 : vector<1x128x128xf32> to vector<128x128xf32>
      %38 = vector.shape_cast %35 : vector<128x128xf32> to vector<1x128x128xf32>
      tpu.vector_store %arg8[%c0_28, %c0_29, %c0_30], %38 {strides = array<i32>} : memref<1x128x128xf32, #tpu.memory_space<vmem>>, vector<1x128x128xf32>,
    } else {
    }
    return
  }
  func.func @transform_0(%arg0: i32, %arg1: i32) -> (i32, i32, i32) {
    %c0_i32 = arith.constant 0 : i32
    %c0_i32_0 = arith.constant 0 : i32
    %c0_i32_1 = arith.constant 0 : i32
    return %arg0, %c0_i32, %c0_i32_0 : i32, i32, i32
  }
  func.func @transform_1(%arg0: i32, %arg1: i32) -> (i32, i32, i32) {
    %c0_i32 = arith.constant 0 : i32
    %c0_i32_0 = arith.constant 0 : i32
    %c0_i32_1 = arith.constant 0 : i32
    return %arg1, %c0_i32, %c0_i32_0 : i32, i32, i32
  }
  func.func @transform_2(%arg0: i32, %arg1: i32) -> (i32, i32, i32) {
    %c0_i32 = arith.constant 0 : i32
    %c0_i32_0 = arith.constant 0 : i32
    %c0_i32_1 = arith.constant 0 : i32
    return %arg1, %c0_i32, %c0_i32_0 : i32, i32, i32
  }
  func.func @transform_3(%arg0: i32, %arg1: i32) -> (i32, i32, i32) {
    %c0_i32 = arith.constant 0 : i32
    %c0_i32_0 = arith.constant 0 : i32
    %c0_i32_1 = arith.constant 0 : i32
    return %arg1, %c0_i32, %c0_i32_0 : i32, i32, i32
  }
  func.func @transform_4(%arg0: i32, %arg1: i32) -> (i32, i32, i32) {
    %c0_i32 = arith.constant 0 : i32
    %c0_i32_0 = arith.constant 0 : i32
    %c0_i32_1 = arith.constant 0 : i32
    return %arg1, %c0_i32, %c0_i32_0 : i32, i32, i32
  }
  func.func @transform_5(%arg0: i32, %arg1: i32) -> (i32, i32) {
    %c0_i32 = arith.constant 0 : i32
    %c0_i32_0 = arith.constant 0 : i32
    %c0_i32_1 = arith.constant 0 : i32
    return %c0_i32, %c0_i32_0 : i32, i32
  }
  func.func @transform_6(%arg0: i32, %arg1: i32) -> (i32, i32, i32) {
    %c0_i32 = arith.constant 0 : i32
    %c0_i32_0 = arith.constant 0 : i32
    %c0_i32_1 = arith.constant 0 : i32
    return %arg0, %c0_i32, %c0_i32_0 : i32, i32, i32
  }
}

</mosaic_0001>

<llo_original>
// kernel: tpu_custom_call.1
$region0: #{tpu_custom_call.1}
  #allocation0 [shape = 'u32[]', space=smem, size = 0x4, offset = 0x4, fixed_abs, tag = 'smem constant byte address 0x4 - core index']
  #allocation1 [shape = 'u32[72,128]{1,0:T(1,128)}', space=vmem, size = 0x9000, scoped, tag = 'internal scratch']
  %s0 = inlined_call_operand.vmem [shape: f32[2,128,128], index: 0, kind: input, shape index: {}]
  %s1 = inlined_call_operand.vmem [shape: f32[8,128,16], index: 1, kind: input, shape index: {}]
  %s2 = inlined_call_operand.vmem [shape: f32[8,128,16], index: 2, kind: input, shape index: {}]
  %s3 = inlined_call_operand.vmem [shape: f32[8,128,16], index: 3, kind: input, shape index: {}]
  %s4 = inlined_call_operand.vmem [shape: f32[8,16,128], index: 4, kind: input, shape index: {}]
  %s5 = inlined_call_operand.vmem [shape: f32[1,128], index: 5, kind: input, shape index: {}]
  %s6 = inlined_call_operand.hbm [shape: f32[2,128,128], index: 6, kind: output, shape index: {}]
  %s7 = sld [smem:[#allocation0]]
  $region65: #{tpu_custom_call.1} parent=0
    _
  %s9 = ssub.s32 1, %s7
  %s10 = scalar_select 0, %s9, %s7
  $region1: #{tpu_custom_call.1} parent=0
    #allocation2 [shape = 'u8[131072]{0}', space=vmem, size = 0x20000, scoped, tag = 'output window, operand 0']
    #allocation3 [shape = 's32[2]{0}', space=sflag, size = 0x8, scoped, tag = 'scoped memory for tpu_custom_call.1']
    %11 = vsyncpa [#allocation3], 0
    %s12 = scalar_lea.sflag [#allocation3], 1
    %13 = vsyncpa %s12, 0
    loop: start=0, step=1, limit=18
    $region2: #{tpu_custom_call.1} parent=1 // loop_pre_header
      _
    $region3: #{tpu_custom_call.1} parent=1 // loop_header
      %s15 = sphi 0, %s19
      %p16 = scmp.ge.s32.totalorder %s15, 18
      %s22 = sphi 0, %s34
      %s23 = sphi 0, %s30
      %s24 = sphi 0, %s22
      %s25 = sphi 0, %s23
      %s26 = sphi 0, %s24
      %s27 = sphi 0, %s25
      %s37 = sphi 0, %s39
      %s40 = sphi 0, %s37
      %s41 = sphi 0, %s40
      %s57 = sphi 0, %s41
      %s63 = sphi 0, %s65
      %s66 = sphi 0, %s63
      %s67 = sphi 0, %s66
      %s83 = sphi 0, %s67
      %s89 = sphi 0, %s91
      %s92 = sphi 0, %s89
      %s93 = sphi 0, %s92
      %s109 = sphi 0, %s93
      %s115 = sphi 0, %s117
      %s118 = sphi 0, %s115
      %s119 = sphi 0, %s118
      %s135 = sphi 0, %s119
      %s141 = sphi 0, %s143
      %s144 = sphi 0, %s141
      %s145 = sphi 0, %s144
      %s161 = sphi 0, %s145
      %s165 = sphi 0, %s165
      %s167 = sphi 0, %s165
      %s168 = sphi 0, %s167
      %s182 = sphi 0, %s168
      %s188 = sphi 0, %s190
      %s191 = sphi 0, %s188
      %s192 = sphi 0, %s191
      %s208 = sphi 0, %s192
    $region4: #{tpu_custom_call.1} parent=1 // loop_header_branch
      %18 = sbr.rel (%p16) target = $region8
    $region5: #{tpu_custom_call.1} parent=1 // loop_body
      %s20 = ssub.s32 %s15, 1
      %s21 = ssub.s32 %s15, 2
      %s28 = sadd.s32 1, %s23
      %p29 = scmp.ge.s32.totalorder %s28, 8
      %s30 = scalar_select %p29, 0, %s28
      %s31 = sadd.s32 1, %s22
      %s32 = scalar_select %p29, %s31, %s22
      %p33 = scmp.ge.s32.totalorder %s32, 2
      %s34 = scalar_select %p33, 0, %s32
      %s35 = ssub.s32 %s22, %s34
      %p36 = scmp.eq.s32.totalorder %s35, 0
      %s38 = sadd.s32 %s37, 1
      %s39 = scalar_select %p36, %s37, %s38
      %p42 = pneg %p36
      %p43 = scmp.eq.s32.totalorder %s15, 15
      %p44 = por %p42, %p43
      %p45 = scmp.ne.s32.totalorder %s37, %s40
      %p46 = scmp.eq.s32.totalorder %s15, 0
      %p47 = por %p45, %p46
      %p48 = scmp.ne.s32.totalorder %s37, %s40
      %p49 = scmp.eq.s32.totalorder %s20, 15
      %p50 = por %p48, %p49
      %p51 = scmp.ne.s32.totalorder %s40, %s41
      %p52 = scmp.eq.s32.totalorder %s20, 0
      %p53 = por %p51, %p52
      %p54 = scmp.ne.s32.totalorder %s40, %s41
      %p55 = scmp.eq.s32.totalorder %s21, 15
      %p56 = por %p54, %p55
      %p58 = scmp.ne.s32.totalorder %s41, %s57
      %p59 = scmp.eq.s32.totalorder %s21, 0
      %p60 = por %p58, %p59
      %s61 = ssub.s32 %s23, %s30
      %p62 = scmp.eq.s32.totalorder %s61, 0
      %s64 = sadd.s32 %s63, 1
      %s65 = scalar_select %p62, %s63, %s64
      %p68 = pneg %p62
      %p69 = scmp.eq.s32.totalorder %s15, 15
      %p70 = por %p68, %p69
      %p71 = scmp.ne.s32.totalorder %s63, %s66
      %p72 = scmp.eq.s32.totalorder %s15, 0
      %p73 = por %p71, %p72
      %p74 = scmp.ne.s32.totalorder %s63, %s66
      %p75 = scmp.eq.s32.totalorder %s20, 15
      %p76 = por %p74, %p75
      %p77 = scmp.ne.s32.totalorder %s66, %s67
      %p78 = scmp.eq.s32.totalorder %s20, 0
      %p79 = por %p77, %p78
      %p80 = scmp.ne.s32.totalorder %s66, %s67
      %p81 = scmp.eq.s32.totalorder %s21, 15
      %p82 = por %p80, %p81
      %p84 = scmp.ne.s32.totalorder %s67, %s83
      %p85 = scmp.eq.s32.totalorder %s21, 0
      %p86 = por %p84, %p85
      %s87 = ssub.s32 %s23, %s30
      %p88 = scmp.eq.s32.totalorder %s87, 0
      %s90 = sadd.s32 %s89, 1
      %s91 = scalar_select %p88, %s89, %s90
      %p94 = pneg %p88
      %p95 = scmp.eq.s32.totalorder %s15, 15
      %p96 = por %p94, %p95
      %p97 = scmp.ne.s32.totalorder %s89, %s92
      %p98 = scmp.eq.s32.totalorder %s15, 0
      %p99 = por %p97, %p98
      %p100 = scmp.ne.s32.totalorder %s89, %s92
      %p101 = scmp.eq.s32.totalorder %s20, 15
      %p102 = por %p100, %p101
      %p103 = scmp.ne.s32.totalorder %s92, %s93
      %p104 = scmp.eq.s32.totalorder %s20, 0
      %p105 = por %p103, %p104
      %p106 = scmp.ne.s32.totalorder %s92, %s93
      %p107 = scmp.eq.s32.totalorder %s21, 15
      %p108 = por %p106, %p107
      %p110 = scmp.ne.s32.totalorder %s93, %s109
      %p111 = scmp.eq.s32.totalorder %s21, 0
      %p112 = por %p110, %p111
      %s113 = ssub.s32 %s23, %s30
      %p114 = scmp.eq.s32.totalorder %s113, 0
      %s116 = sadd.s32 %s115, 1
      %s117 = scalar_select %p114, %s115, %s116
      %p120 = pneg %p114
      %p121 = scmp.eq.s32.totalorder %s15, 15
      %p122 = por %p120, %p121
      %p123 = scmp.ne.s32.totalorder %s115, %s118
      %p124 = scmp.eq.s32.totalorder %s15, 0
      %p125 = por %p123, %p124
      %p126 = scmp.ne.s32.totalorder %s115, %s118
      %p127 = scmp.eq.s32.totalorder %s20, 15
      %p128 = por %p126, %p127
      %p129 = scmp.ne.s32.totalorder %s118, %s119
      %p130 = scmp.eq.s32.totalorder %s20, 0
      %p131 = por %p129, %p130
      %p132 = scmp.ne.s32.totalorder %s118, %s119
      %p133 = scmp.eq.s32.totalorder %s21, 15
      %p134 = por %p132, %p133
      %p136 = scmp.ne.s32.totalorder %s119, %s135
      %p137 = scmp.eq.s32.totalorder %s21, 0
      %p138 = por %p136, %p137
      %s139 = ssub.s32 %s23, %s30
      %p140 = scmp.eq.s32.totalorder %s139, 0
      %s142 = sadd.s32 %s141, 1
      %s143 = scalar_select %p140, %s141, %s142
      %p146 = pneg %p140
      %p147 = scmp.eq.s32.totalorder %s15, 15
      %p148 = por %p146, %p147
      %p149 = scmp.ne.s32.totalorder %s141, %s144
      %p150 = scmp.eq.s32.totalorder %s15, 0
      %p151 = por %p149, %p150
      %p152 = scmp.ne.s32.totalorder %s141, %s144
      %p153 = scmp.eq.s32.totalorder %s20, 15
      %p154 = por %p152, %p153
      %p155 = scmp.ne.s32.totalorder %s144, %s145
      %p156 = scmp.eq.s32.totalorder %s20, 0
      %p157 = por %p155, %p156
      %p158 = scmp.ne.s32.totalorder %s144, %s145
      %p159 = scmp.eq.s32.totalorder %s21, 15
      %p160 = por %p158, %p159
      %p162 = scmp.ne.s32.totalorder %s145, %s161
      %p163 = scmp.eq.s32.totalorder %s21, 0
      %p164 = por %p162, %p163
      %s166 = sadd.s32 %s165, 1
      %p169 = scmp.eq.s32.totalorder %s15, 15
      %p170 = scmp.ne.s32.totalorder %s165, %s167
      %p171 = scmp.eq.s32.totalorder %s15, 0
      %p172 = por %p170, %p171
      %p173 = scmp.ne.s32.totalorder %s165, %s167
      %p174 = scmp.eq.s32.totalorder %s20, 15
      %p175 = por %p173, %p174
      %p176 = scmp.ne.s32.totalorder %s167, %s168
      %p177 = scmp.eq.s32.totalorder %s20, 0
      %p178 = por %p176, %p177
      %p179 = scmp.ne.s32.totalorder %s167, %s168
      %p180 = scmp.eq.s32.totalorder %s21, 15
      %p181 = por %p179, %p180
      %p183 = scmp.ne.s32.totalorder %s168, %s182
      %p184 = scmp.eq.s32.totalorder %s21, 0
      %p185 = por %p183, %p184
      %s186 = ssub.s32 %s22, %s34
      %p187 = scmp.eq.s32.totalorder %s186, 0
      %s189 = sadd.s32 %s188, 1
      %s190 = scalar_select %p187, %s188, %s189
      %p193 = pneg %p187
      %p194 = scmp.eq.s32.totalorder %s15, 15
      %p195 = por %p193, %p194
      %p196 = scmp.ne.s32.totalorder %s188, %s191
      %p197 = scmp.eq.s32.totalorder %s15, 0
      %p198 = por %p196, %p197
      %p199 = scmp.ne.s32.totalorder %s188, %s191
      %p200 = scmp.eq.s32.totalorder %s20, 15
      %p201 = por %p199, %p200
      %p202 = scmp.ne.s32.totalorder %s191, %s192
      %p203 = scmp.eq.s32.totalorder %s20, 0
      %p204 = por %p202, %p203
      %p205 = scmp.ne.s32.totalorder %s191, %s192
      %p206 = scmp.eq.s32.totalorder %s21, 15
      %p207 = por %p205, %p206
      %p209 = scmp.ne.s32.totalorder %s192, %s208
      %p210 = scmp.eq.s32.totalorder %s21, 0
      %p211 = por %p209, %p210
      %p212 = scmp.le.s32.totalorder 1, %s15
      %p213 = scmp.lt.s32.totalorder %s15, 17
      %p214 = pnand %p212, %p213
      %p215 = pneg %p214
      // Predicated region
      $region9: #{tpu_custom_call.1} parent=5 // pred_check
        _
      $region10: #{tpu_custom_call.1} parent=5 // pred_check_branch
        %217 = sbr.rel (%p214) target = $region12
      $region11: #{tpu_custom_call.1} parent=5 // pred_region
        %s218 = ssub.s32 %s15, 1
        // Predicated region
        $region13: #{tpu_custom_call.1} parent=11 // pred_check
          %p219 = pneg %p178
        $region14: #{tpu_custom_call.1} parent=11 // pred_check_branch
          %221 = sbr.rel (%p219) target = $region16
        $region15: #{tpu_custom_call.1} parent=11 // pred_region
          _
        $region16: #{tpu_custom_call.1} parent=11 // pred_fallthru
          _
      $region12: #{tpu_custom_call.1} parent=5 // pred_fallthru
        _
      %p222 = scmp.lt.s32.totalorder %s15, 16
      // Predicated region
      $region17: #{tpu_custom_call.1} parent=5 // pred_check
        %p223 = pneg %p222
      $region18: #{tpu_custom_call.1} parent=5 // pred_check_branch
        %225 = sbr.rel (%p223) target = $region20
      $region19: #{tpu_custom_call.1} parent=5 // pred_region
        // Predicated region
        $region21: #{tpu_custom_call.1} parent=19 // pred_check
          %p226 = pneg %p47
        $region22: #{tpu_custom_call.1} parent=19 // pred_check_branch
          %228 = sbr.rel (%p226) target = $region24
        $region23: #{tpu_custom_call.1} parent=19 // pred_region
          %p229 = scmp.lt.s32.totalorder %s22, 1
          %s230 = scalar_select %p229, %s22, 1
          %s231 = smul.addr %s230, 16
          %s232 = smul.addr %s231, 8
          %s233 = scalar_lea.vmem %s0, %s232
        $region24: #{tpu_custom_call.1} parent=19 // pred_fallthru
          _
        // Predicated region
        $region25: #{tpu_custom_call.1} parent=19 // pred_check
          %p234 = pneg %p73
        $region26: #{tpu_custom_call.1} parent=19 // pred_check_branch
          %236 = sbr.rel (%p234) target = $region28
        $region27: #{tpu_custom_call.1} parent=19 // pred_region
          %p237 = scmp.lt.s32.totalorder %s23, 7
          %s238 = scalar_select %p237, %s23, 7
          %s239 = smul.addr %s238, 16
          %s240 = smul.addr %s239, 8
          %s241 = scalar_lea.vmem %s1, %s240
        $region28: #{tpu_custom_call.1} parent=19 // pred_fallthru
          _
        // Predicated region
        $region29: #{tpu_custom_call.1} parent=19 // pred_check
          %p242 = pneg %p99
        $region30: #{tpu_custom_call.1} parent=19 // pred_check_branch
          %244 = sbr.rel (%p242) target = $region32
        $region31: #{tpu_custom_call.1} parent=19 // pred_region
          %p245 = scmp.lt.s32.totalorder %s23, 7
          %s246 = scalar_select %p245, %s23, 7
          %s247 = smul.addr %s246, 16
          %s248 = smul.addr %s247, 8
          %s249 = scalar_lea.vmem %s2, %s248
        $region32: #{tpu_custom_call.1} parent=19 // pred_fallthru
          _
        // Predicated region
        $region33: #{tpu_custom_call.1} parent=19 // pred_check
          %p250 = pneg %p125
        $region34: #{tpu_custom_call.1} parent=19 // pred_check_branch
          %252 = sbr.rel (%p250) target = $region36
        $region35: #{tpu_custom_call.1} parent=19 // pred_region
          %p253 = scmp.lt.s32.totalorder %s23, 7
          %s254 = scalar_select %p253, %s23, 7
          %s255 = smul.addr %s254, 16
          %s256 = smul.addr %s255, 8
          %s257 = scalar_lea.vmem %s3, %s256
        $region36: #{tpu_custom_call.1} parent=19 // pred_fallthru
          _
        // Predicated region
        $region37: #{tpu_custom_call.1} parent=19 // pred_check
          %p258 = pneg %p151
        $region38: #{tpu_custom_call.1} parent=19 // pred_check_branch
          %260 = sbr.rel (%p258) target = $region40
        $region39: #{tpu_custom_call.1} parent=19 // pred_region
          %p261 = scmp.lt.s32.totalorder %s23, 7
          %s262 = scalar_select %p261, %s23, 7
          %s263 = smul.addr %s262, 2
          %s264 = smul.addr %s263, 8
          %s265 = scalar_lea.vmem %s4, %s264
        $region40: #{tpu_custom_call.1} parent=19 // pred_fallthru
          _
      $region20: #{tpu_custom_call.1} parent=5 // pred_fallthru
        _
      %p266 = scmp.le.s32.totalorder 1, %s15
      %p267 = scmp.lt.s32.totalorder %s15, 17
      %p268 = pnand %p266, %p267
      %p269 = pneg %p268
      // Predicated region
      $region41: #{tpu_custom_call.1} parent=5 // pred_check
        _
      $region42: #{tpu_custom_call.1} parent=5 // pred_check_branch
        %271 = sbr.rel (%p268) target = $region44
      $region43: #{tpu_custom_call.1} parent=5 // pred_region
        %s272 = ssub.s32 %s15, 1
        %p273 = scmp.lt.s32.totalorder %s24, 1
        %s274 = scalar_select %p273, %s24, 1
        %s275 = smul.addr %s274, 16
        %s276 = smul.addr %s275, 8
        %s277 = scalar_lea.vmem %s0, %s276
        %p278 = pneg %p53
        %p279 = pneg %p50
        %p280 = scmp.lt.s32.totalorder %s25, 7
        %s281 = scalar_select %p280, %s25, 7
        %s282 = smul.addr %s281, 16
        %s283 = smul.addr %s282, 8
        %s284 = scalar_lea.vmem %s1, %s283
        %p285 = pneg %p79
        %p286 = pneg %p76
        %p287 = scmp.lt.s32.totalorder %s25, 7
        %s288 = scalar_select %p287, %s25, 7
        %s289 = smul.addr %s288, 16
        %s290 = smul.addr %s289, 8
        %s291 = scalar_lea.vmem %s2, %s290
        %p292 = pneg %p105
        %p293 = pneg %p102
        %p294 = scmp.lt.s32.totalorder %s25, 7
        %s295 = scalar_select %p294, %s25, 7
        %s296 = smul.addr %s295, 16
        %s297 = smul.addr %s296, 8
        %s298 = scalar_lea.vmem %s3, %s297
        %p299 = pneg %p131
        %p300 = pneg %p128
        %p301 = scmp.lt.s32.totalorder %s25, 7
        %s302 = scalar_select %p301, %s25, 7
        %s303 = smul.addr %s302, 2
        %s304 = smul.addr %s303, 8
        %s305 = scalar_lea.vmem %s4, %s304
        %p306 = pneg %p157
        %p307 = pneg %p154
        %p308 = pneg %p178
        %p309 = pneg %p175
        %p310 = pneg %p204
        %p311 = pneg %p201
        %s312 = sand.u32 %s191, 1
        %s313 = scalar_lea.sflag [#allocation3], %s312
        %s314 = sand.u32 %s191, 1
        %s315 = smul.addr %s314, 128
        %s316 = scalar_lea.vmem [#allocation2], %s315
        %p317 = scmp.lt.s32.totalorder %s24, 1
        %s318 = scalar_select %p317, %s24, 1
        %s319 = smul.addr %s318, 16
        %s320 = smul.addr %s319, 8
        %s321 = scalar_lea.vmem %s0, %s320
        %p322 = scmp.lt.s32.totalorder %s25, 7
        %s323 = scalar_select %p322, %s25, 7
        %s324 = smul.addr %s323, 16
        %s325 = smul.addr %s324, 8
        %s326 = scalar_lea.vmem %s1, %s325
        %p327 = scmp.lt.s32.totalorder %s25, 7
        %s328 = scalar_select %p327, %s25, 7
        %s329 = smul.addr %s328, 16
        %s330 = smul.addr %s329, 8
        %s331 = scalar_lea.vmem %s2, %s330
        %p332 = scmp.lt.s32.totalorder %s25, 7
        %s333 = scalar_select %p332, %s25, 7
        %s334 = smul.addr %s333, 16
        %s335 = smul.addr %s334, 8
        %s336 = scalar_lea.vmem %s3, %s335
        %p337 = scmp.lt.s32.totalorder %s25, 7
        %s338 = scalar_select %p337, %s25, 7
        %s339 = smul.addr %s338, 2
        %s340 = smul.addr %s339, 8
        %s341 = scalar_lea.vmem %s4, %s340
        %v342 = vld [vmem:[%s321] sm:$0xff]
        %v343 = vld [vmem:[%s321 + $0x8] sm:$0xff]
        %v344 = vld [vmem:[%s321 + $0x10] sm:$0xff]
        %v345 = vld [vmem:[%s321 + $0x18] sm:$0xff]
        %v346 = vld [vmem:[%s321 + $0x20] sm:$0xff]
        %v347 = vld [vmem:[%s321 + $0x28] sm:$0xff]
        %v348 = vld [vmem:[%s321 + $0x30] sm:$0xff]
        %v349 = vld [vmem:[%s321 + $0x38] sm:$0xff]
        %v350 = vld [vmem:[%s321 + $0x40] sm:$0xff]
        %v351 = vld [vmem:[%s321 + $0x48] sm:$0xff]
        %v352 = vld [vmem:[%s321 + $0x50] sm:$0xff]
        %v353 = vld [vmem:[%s321 + $0x58] sm:$0xff]
        %v354 = vld [vmem:[%s321 + $0x60] sm:$0xff]
        %v355 = vld [vmem:[%s321 + $0x68] sm:$0xff]
        %v356 = vld [vmem:[%s321 + $0x70] sm:$0xff]
        %v357 = vld [vmem:[%s321 + $0x78] sm:$0xff]
        %v358 = vld [vmem:[%s326] sm:$0xff]
        %v359 = vld [vmem:[%s326 + $0x8] sm:$0xff]
        %v360 = vld [vmem:[%s326 + $0x10] sm:$0xff]
        %v361 = vld [vmem:[%s326 + $0x18] sm:$0xff]
        %v362 = vld [vmem:[%s326 + $0x20] sm:$0xff]
        %v363 = vld [vmem:[%s326 + $0x28] sm:$0xff]
        %v364 = vld [vmem:[%s326 + $0x30] sm:$0xff]
        %v365 = vld [vmem:[%s326 + $0x38] sm:$0xff]
        %v366 = vld [vmem:[%s326 + $0x40] sm:$0xff]
        %v367 = vld [vmem:[%s326 + $0x48] sm:$0xff]
        %v368 = vld [vmem:[%s326 + $0x50] sm:$0xff]
        %v369 = vld [vmem:[%s326 + $0x58] sm:$0xff]
        %v370 = vld [vmem:[%s326 + $0x60] sm:$0xff]
        %v371 = vld [vmem:[%s326 + $0x68] sm:$0xff]
        %v372 = vld [vmem:[%s326 + $0x70] sm:$0xff]
        %v373 = vld [vmem:[%s326 + $0x78] sm:$0xff]
        %374 = vmatpush.msra.mxu0 %v373
        %375 = vmatpush.msra.mxu0 %v372
        %376 = vmatpush.msra.mxu0 %v371
        %377 = vmatpush.msra.mxu0 %v370
        %378 = vmatpush.msra.mxu0 %v369
        %379 = vmatpush.msra.mxu0 %v368
        %380 = vmatpush.msra.mxu0 %v367
        %381 = vmatpush.msra.mxu0 %v366
        %382 = vmatpush.msra.mxu0 %v365
        %383 = vmatpush.msra.mxu0 %v364
        %384 = vmatpush.msra.mxu0 %v363
        %385 = vmatpush.msra.mxu0 %v362
        %386 = vmatpush.msra.mxu0 %v361
        %387 = vmatpush.msra.mxu0 %v360
        %388 = vmatpush.msra.mxu0 %v359
        %389 = vmatpush.msra.mxu0 %v358
        %390 = vmatmul.f32.gmra.mxu0 %v342
        %v391 = vpop.f32.mrf.mxu0
        %v392 = vadd.f32 0.0, %v391
        %393 = vmatmul.f32.gmra.mxu0 %v343
        %v394 = vpop.f32.mrf.mxu0
        %v395 = vadd.f32 0.0, %v394
        %396 = vmatmul.f32.gmra.mxu0 %v344
        %v397 = vpop.f32.mrf.mxu0
        %v398 = vadd.f32 0.0, %v397
        %399 = vmatmul.f32.gmra.mxu0 %v345
        %v400 = vpop.f32.mrf.mxu0
        %v401 = vadd.f32 0.0, %v400
        %402 = vmatmul.f32.gmra.mxu0 %v346
        %v403 = vpop.f32.mrf.mxu0
        %v404 = vadd.f32 0.0, %v403
        %405 = vmatmul.f32.gmra.mxu0 %v347
        %v406 = vpop.f32.mrf.mxu0
        %v407 = vadd.f32 0.0, %v406
        %408 = vmatmul.f32.gmra.mxu0 %v348
        %v409 = vpop.f32.mrf.mxu0
        %v410 = vadd.f32 0.0, %v409
        %411 = vmatmul.f32.gmra.mxu0 %v349
        %v412 = vpop.f32.mrf.mxu0
        %v413 = vadd.f32 0.0, %v412
        %414 = vmatmul.f32.gmra.mxu0 %v350
        %v415 = vpop.f32.mrf.mxu0
        %v416 = vadd.f32 0.0, %v415
        %417 = vmatmul.f32.gmra.mxu0 %v351
        %v418 = vpop.f32.mrf.mxu0
        %v419 = vadd.f32 0.0, %v418
        %420 = vmatmul.f32.gmra.mxu0 %v352
        %v421 = vpop.f32.mrf.mxu0
        %v422 = vadd.f32 0.0, %v421
        %423 = vmatmul.f32.gmra.mxu0 %v353
        %v424 = vpop.f32.mrf.mxu0
        %v425 = vadd.f32 0.0, %v424
        %426 = vmatmul.f32.gmra.mxu0 %v354
        %v427 = vpop.f32.mrf.mxu0
        %v428 = vadd.f32 0.0, %v427
        %429 = vmatmul.f32.gmra.mxu0 %v355
        %v430 = vpop.f32.mrf.mxu0
        %v431 = vadd.f32 0.0, %v430
        %432 = vmatmul.f32.gmra.mxu0 %v356
        %v433 = vpop.f32.mrf.mxu0
        %v434 = vadd.f32 0.0, %v433
        %435 = vmatmul.f32.gmra.mxu0 %v357
        %v436 = vpop.f32.mrf.mxu0
        %v437 = vadd.f32 0.0, %v436
        %438 = vdwg.mxu0
        %v439 = vld [vmem:[%s331] sm:$0xff]
        %v440 = vld [vmem:[%s331 + $0x8] sm:$0xff]
        %v441 = vld [vmem:[%s331 + $0x10] sm:$0xff]
        %v442 = vld [vmem:[%s331 + $0x18] sm:$0xff]
        %v443 = vld [vmem:[%s331 + $0x20] sm:$0xff]
        %v444 = vld [vmem:[%s331 + $0x28] sm:$0xff]
        %v445 = vld [vmem:[%s331 + $0x30] sm:$0xff]
        %v446 = vld [vmem:[%s331 + $0x38] sm:$0xff]
        %v447 = vld [vmem:[%s331 + $0x40] sm:$0xff]
        %v448 = vld [vmem:[%s331 + $0x48] sm:$0xff]
        %v449 = vld [vmem:[%s331 + $0x50] sm:$0xff]
        %v450 = vld [vmem:[%s331 + $0x58] sm:$0xff]
        %v451 = vld [vmem:[%s331 + $0x60] sm:$0xff]
        %v452 = vld [vmem:[%s331 + $0x68] sm:$0xff]
        %v453 = vld [vmem:[%s331 + $0x70] sm:$0xff]
        %v454 = vld [vmem:[%s331 + $0x78] sm:$0xff]
        %455 = vmatpush.msra.mxu0 %v454
        %456 = vmatpush.msra.mxu0 %v453
        %457 = vmatpush.msra.mxu0 %v452
        %458 = vmatpush.msra.mxu0 %v451
        %459 = vmatpush.msra.mxu0 %v450
        %460 = vmatpush.msra.mxu0 %v449
        %461 = vmatpush.msra.mxu0 %v448
        %462 = vmatpush.msra.mxu0 %v447
        %463 = vmatpush.msra.mxu0 %v446
        %464 = vmatpush.msra.mxu0 %v445
        %465 = vmatpush.msra.mxu0 %v444
        %466 = vmatpush.msra.mxu0 %v443
        %467 = vmatpush.msra.mxu0 %v442
        %468 = vmatpush.msra.mxu0 %v441
        %469 = vmatpush.msra.mxu0 %v440
        %470 = vmatpush.msra.mxu0 %v439
        %471 = vmatmul.f32.gmra.mxu0 %v342
        %v472 = vpop.f32.mrf.mxu0
        %v473 = vadd.f32 0.0, %v472
        %474 = vmatmul.f32.gmra.mxu0 %v343
        %v475 = vpop.f32.mrf.mxu0
        %v476 = vadd.f32 0.0, %v475
        %477 = vmatmul.f32.gmra.mxu0 %v344
        %v478 = vpop.f32.mrf.mxu0
        %v479 = vadd.f32 0.0, %v478
        %480 = vmatmul.f32.gmra.mxu0 %v345
        %v481 = vpop.f32.mrf.mxu0
        %v482 = vadd.f32 0.0, %v481
        %483 = vmatmul.f32.gmra.mxu0 %v346
        %v484 = vpop.f32.mrf.mxu0
        %v485 = vadd.f32 0.0, %v484
        %486 = vmatmul.f32.gmra.mxu0 %v347
        %v487 = vpop.f32.mrf.mxu0
        %v488 = vadd.f32 0.0, %v487
        %489 = vmatmul.f32.gmra.mxu0 %v348
        %v490 = vpop.f32.mrf.mxu0
        %v491 = vadd.f32 0.0, %v490
        %492 = vmatmul.f32.gmra.mxu0 %v349
        %v493 = vpop.f32.mrf.mxu0
        %v494 = vadd.f32 0.0, %v493
        %495 = vmatmul.f32.gmra.mxu0 %v350
        %v496 = vpop.f32.mrf.mxu0
        %v497 = vadd.f32 0.0, %v496
        %498 = vmatmul.f32.gmra.mxu0 %v351
        %v499 = vpop.f32.mrf.mxu0
        %v500 = vadd.f32 0.0, %v499
        %501 = vmatmul.f32.gmra.mxu0 %v352
        %v502 = vpop.f32.mrf.mxu0
        %v503 = vadd.f32 0.0, %v502
        %504 = vmatmul.f32.gmra.mxu0 %v353
        %v505 = vpop.f32.mrf.mxu0
        %v506 = vadd.f32 0.0, %v505
        %507 = vmatmul.f32.gmra.mxu0 %v354
        %v508 = vpop.f32.mrf.mxu0
        %v509 = vadd.f32 0.0, %v508
        %510 = vmatmul.f32.gmra.mxu0 %v355
        %v511 = vpop.f32.mrf.mxu0
        %v512 = vadd.f32 0.0, %v511
        %513 = vmatmul.f32.gmra.mxu0 %v356
        %v514 = vpop.f32.mrf.mxu0
        %v515 = vadd.f32 0.0, %v514
        %516 = vmatmul.f32.gmra.mxu0 %v357
        %v517 = vpop.f32.mrf.mxu0
        %v518 = vadd.f32 0.0, %v517
        %519 = vdwg.mxu0
        %v520 = vld [vmem:[%s336] sm:$0xff]
        %v521 = vld [vmem:[%s336 + $0x8] sm:$0xff]
        %v522 = vld [vmem:[%s336 + $0x10] sm:$0xff]
        %v523 = vld [vmem:[%s336 + $0x18] sm:$0xff]
        %v524 = vld [vmem:[%s336 + $0x20] sm:$0xff]
        %v525 = vld [vmem:[%s336 + $0x28] sm:$0xff]
        %v526 = vld [vmem:[%s336 + $0x30] sm:$0xff]
        %v527 = vld [vmem:[%s336 + $0x38] sm:$0xff]
        %v528 = vld [vmem:[%s336 + $0x40] sm:$0xff]
        %v529 = vld [vmem:[%s336 + $0x48] sm:$0xff]
        %v530 = vld [vmem:[%s336 + $0x50] sm:$0xff]
        %v531 = vld [vmem:[%s336 + $0x58] sm:$0xff]
        %v532 = vld [vmem:[%s336 + $0x60] sm:$0xff]
        %v533 = vld [vmem:[%s336 + $0x68] sm:$0xff]
        %v534 = vld [vmem:[%s336 + $0x70] sm:$0xff]
        %v535 = vld [vmem:[%s336 + $0x78] sm:$0xff]
        %536 = vmatpush.msra.mxu0 %v535
        %537 = vmatpush.msra.mxu0 %v534
        %538 = vmatpush.msra.mxu0 %v533
        %539 = vmatpush.msra.mxu0 %v532
        %540 = vmatpush.msra.mxu0 %v531
        %541 = vmatpush.msra.mxu0 %v530
        %542 = vmatpush.msra.mxu0 %v529
        %543 = vmatpush.msra.mxu0 %v528
        %544 = vmatpush.msra.mxu0 %v527
        %545 = vmatpush.msra.mxu0 %v526
        %546 = vmatpush.msra.mxu0 %v525
        %547 = vmatpush.msra.mxu0 %v524
        %548 = vmatpush.msra.mxu0 %v523
        %549 = vmatpush.msra.mxu0 %v522
        %550 = vmatpush.msra.mxu0 %v521
        %551 = vmatpush.msra.mxu0 %v520
        %552 = vmatmul.f32.gmra.mxu0 %v342
        %v553 = vpop.f32.mrf.mxu0
        %v554 = vadd.f32 0.0, %v553
        %555 = vmatmul.f32.gmra.mxu0 %v343
        %v556 = vpop.f32.mrf.mxu0
        %v557 = vadd.f32 0.0, %v556
        %558 = vmatmul.f32.gmra.mxu0 %v344
        %v559 = vpop.f32.mrf.mxu0
        %v560 = vadd.f32 0.0, %v559
        %561 = vmatmul.f32.gmra.mxu0 %v345
        %v562 = vpop.f32.mrf.mxu0
        %v563 = vadd.f32 0.0, %v562
        %564 = vmatmul.f32.gmra.mxu0 %v346
        %v565 = vpop.f32.mrf.mxu0
        %v566 = vadd.f32 0.0, %v565
        %567 = vmatmul.f32.gmra.mxu0 %v347
        %v568 = vpop.f32.mrf.mxu0
        %v569 = vadd.f32 0.0, %v568
        %570 = vmatmul.f32.gmra.mxu0 %v348
        %v571 = vpop.f32.mrf.mxu0
        %v572 = vadd.f32 0.0, %v571
        %573 = vmatmul.f32.gmra.mxu0 %v349
        %v574 = vpop.f32.mrf.mxu0
        %v575 = vadd.f32 0.0, %v574
        %576 = vmatmul.f32.gmra.mxu0 %v350
        %v577 = vpop.f32.mrf.mxu0
        %v578 = vadd.f32 0.0, %v577
        %579 = vmatmul.f32.gmra.mxu0 %v351
        %v580 = vpop.f32.mrf.mxu0
        %v581 = vadd.f32 0.0, %v580
        %582 = vmatmul.f32.gmra.mxu0 %v352
        %v583 = vpop.f32.mrf.mxu0
        %v584 = vadd.f32 0.0, %v583
        %585 = vmatmul.f32.gmra.mxu0 %v353
        %v586 = vpop.f32.mrf.mxu0
        %v587 = vadd.f32 0.0, %v586
        %588 = vmatmul.f32.gmra.mxu0 %v354
        %v589 = vpop.f32.mrf.mxu0
        %v590 = vadd.f32 0.0, %v589
        %591 = vmatmul.f32.gmra.mxu0 %v355
        %v592 = vpop.f32.mrf.mxu0
        %v593 = vadd.f32 0.0, %v592
        %594 = vmatmul.f32.gmra.mxu0 %v356
        %v595 = vpop.f32.mrf.mxu0
        %v596 = vadd.f32 0.0, %v595
        %597 = vmatmul.f32.gmra.mxu0 %v357
        %v598 = vpop.f32.mrf.mxu0
        %v599 = vadd.f32 0.0, %v598
        %600 = vdwg.mxu0
        %vm601 = vcmask 130048
        %v603 = vsel %vm601, %v392, 0
        %v606 = vsel %vm601, %v395, 0
        %v609 = vsel %vm601, %v398, 0
        %v612 = vsel %vm601, %v401, 0
        %v615 = vsel %vm601, %v404, 0
        %v618 = vsel %vm601, %v407, 0
        %v621 = vsel %vm601, %v410, 0
        %v624 = vsel %vm601, %v413, 0
        %v627 = vsel %vm601, %v416, 0
        %v630 = vsel %vm601, %v419, 0
        %v633 = vsel %vm601, %v422, 0
        %v636 = vsel %vm601, %v425, 0
        %v639 = vsel %vm601, %v428, 0
        %v642 = vsel %vm601, %v431, 0
        %v645 = vsel %vm601, %v434, 0
        %v648 = vsel %vm601, %v437, 0
        %v651 = vsel %vm601, %v473, 0
        %v654 = vsel %vm601, %v476, 0
        %v657 = vsel %vm601, %v479, 0
        %v660 = vsel %vm601, %v482, 0
        %v663 = vsel %vm601, %v485, 0
        %v666 = vsel %vm601, %v488, 0
        %v669 = vsel %vm601, %v491, 0
        %v672 = vsel %vm601, %v494, 0
        %v675 = vsel %vm601, %v497, 0
        %v678 = vsel %vm601, %v500, 0
        %v681 = vsel %vm601, %v503, 0
        %v684 = vsel %vm601, %v506, 0
        %v687 = vsel %vm601, %v509, 0
        %v690 = vsel %vm601, %v512, 0
        %v693 = vsel %vm601, %v515, 0
        %v696 = vsel %vm601, %v518, 0
        %698 = vmatpush.xpose.msra.mxu0 %v696
        %699 = vmatpush.xpose.msra.mxu0 %v693
        %700 = vmatpush.xpose.msra.mxu0 %v690
        %701 = vmatpush.xpose.msra.mxu0 %v687
        %702 = vmatpush.xpose.msra.mxu0 %v684
        %703 = vmatpush.xpose.msra.mxu0 %v681
        %704 = vmatpush.xpose.msra.mxu0 %v678
        %705 = vmatpush.xpose.msra.mxu0 %v675
        %706 = vmatpush.xpose.msra.mxu0 %v672
        %707 = vmatpush.xpose.msra.mxu0 %v669
        %708 = vmatpush.xpose.msra.mxu0 %v666
        %709 = vmatpush.xpose.msra.mxu0 %v663
        %710 = vmatpush.xpose.msra.mxu0 %v660
        %711 = vmatpush.xpose.msra.mxu0 %v657
        %712 = vmatpush.xpose.msra.mxu0 %v654
        %713 = vmatpush.xpose.msra.mxu0 %v651
        %714 = vmatmul.f32.gmra.mxu0 %v603
        %v715 = vpop.f32.mrf.mxu0
        %v716 = vadd.f32 0.0, %v715
        %717 = vmatmul.f32.gmra.mxu0 %v606
        %v718 = vpop.f32.mrf.mxu0
        %v719 = vadd.f32 0.0, %v718
        %720 = vmatmul.f32.gmra.mxu0 %v609
        %v721 = vpop.f32.mrf.mxu0
        %v722 = vadd.f32 0.0, %v721
        %723 = vmatmul.f32.gmra.mxu0 %v612
        %v724 = vpop.f32.mrf.mxu0
        %v725 = vadd.f32 0.0, %v724
        %726 = vmatmul.f32.gmra.mxu0 %v615
        %v727 = vpop.f32.mrf.mxu0
        %v728 = vadd.f32 0.0, %v727
        %729 = vmatmul.f32.gmra.mxu0 %v618
        %v730 = vpop.f32.mrf.mxu0
        %v731 = vadd.f32 0.0, %v730
        %732 = vmatmul.f32.gmra.mxu0 %v621
        %v733 = vpop.f32.mrf.mxu0
        %v734 = vadd.f32 0.0, %v733
        %735 = vmatmul.f32.gmra.mxu0 %v624
        %v736 = vpop.f32.mrf.mxu0
        %v737 = vadd.f32 0.0, %v736
        %738 = vmatmul.f32.gmra.mxu0 %v627
        %v739 = vpop.f32.mrf.mxu0
        %v740 = vadd.f32 0.0, %v739
        %741 = vmatmul.f32.gmra.mxu0 %v630
        %v742 = vpop.f32.mrf.mxu0
        %v743 = vadd.f32 0.0, %v742
        %744 = vmatmul.f32.gmra.mxu0 %v633
        %v745 = vpop.f32.mrf.mxu0
        %v746 = vadd.f32 0.0, %v745
        %747 = vmatmul.f32.gmra.mxu0 %v636
        %v748 = vpop.f32.mrf.mxu0
        %v749 = vadd.f32 0.0, %v748
        %750 = vmatmul.f32.gmra.mxu0 %v639
        %v751 = vpop.f32.mrf.mxu0
        %v752 = vadd.f32 0.0, %v751
        %753 = vmatmul.f32.gmra.mxu0 %v642
        %v754 = vpop.f32.mrf.mxu0
        %v755 = vadd.f32 0.0, %v754
        %756 = vmatmul.f32.gmra.mxu0 %v645
        %v757 = vpop.f32.mrf.mxu0
        %v758 = vadd.f32 0.0, %v757
        %759 = vmatmul.f32.gmra.mxu0 %v648
        %v760 = vpop.f32.mrf.mxu0
        %v761 = vadd.f32 0.0, %v760
        %762 = vdwg.mxu0
        %v763 = vmul.f32 %v716, 0.088388346
        %v764 = vmul.f32 %v719, 0.088388346
        %v765 = vmul.f32 %v722, 0.088388346
        %v766 = vmul.f32 %v725, 0.088388346
        %v767 = vmul.f32 %v728, 0.088388346
        %v768 = vmul.f32 %v731, 0.088388346
        %v769 = vmul.f32 %v734, 0.088388346
        %v770 = vmul.f32 %v737, 0.088388346
        %v771 = vmul.f32 %v740, 0.088388346
        %v772 = vmul.f32 %v743, 0.088388346
        %v773 = vmul.f32 %v746, 0.088388346
        %v774 = vmul.f32 %v749, 0.088388346
        %v775 = vmul.f32 %v752, 0.088388346
        %v776 = vmul.f32 %v755, 0.088388346
        %v777 = vmul.f32 %v758, 0.088388346
        %v778 = vmul.f32 %v761, 0.088388346
        %779 = vmax.xlane.f32.xlu0 %v763
        %v780 = vpop.xlane.xlu0 %779
        %781 = vmax.xlane.f32.xlu0 %v764
        %v782 = vpop.xlane.xlu0 %781
        %783 = vmax.xlane.f32.xlu0 %v765
        %v784 = vpop.xlane.xlu0 %783
        %785 = vmax.xlane.f32.xlu0 %v766
        %v786 = vpop.xlane.xlu0 %785
        %787 = vmax.xlane.f32.xlu0 %v767
        %v788 = vpop.xlane.xlu0 %787
        %789 = vmax.xlane.f32.xlu0 %v768
        %v790 = vpop.xlane.xlu0 %789
        %791 = vmax.xlane.f32.xlu0 %v769
        %v792 = vpop.xlane.xlu0 %791
        %793 = vmax.xlane.f32.xlu0 %v770
        %v794 = vpop.xlane.xlu0 %793
        %795 = vmax.xlane.f32.xlu0 %v771
        %v796 = vpop.xlane.xlu0 %795
        %797 = vmax.xlane.f32.xlu0 %v772
        %v798 = vpop.xlane.xlu0 %797
        %799 = vmax.xlane.f32.xlu0 %v773
        %v800 = vpop.xlane.xlu0 %799
        %801 = vmax.xlane.f32.xlu0 %v774
        %v802 = vpop.xlane.xlu0 %801
        %803 = vmax.xlane.f32.xlu0 %v775
        %v804 = vpop.xlane.xlu0 %803
        %805 = vmax.xlane.f32.xlu0 %v776
        %v806 = vpop.xlane.xlu0 %805
        %807 = vmax.xlane.f32.xlu0 %v777
        %v808 = vpop.xlane.xlu0 %807
        %809 = vmax.xlane.f32.xlu0 %v778
        %v810 = vpop.xlane.xlu0 %809
        %v811 = vsub.f32 %v763, %v780
        %v812 = vsub.f32 %v764, %v782
        %v813 = vsub.f32 %v765, %v784
        %v814 = vsub.f32 %v766, %v786
        %v815 = vsub.f32 %v767, %v788
        %v816 = vsub.f32 %v768, %v790
        %v817 = vsub.f32 %v769, %v792
        %v818 = vsub.f32 %v770, %v794
        %v819 = vsub.f32 %v771, %v796
        %v820 = vsub.f32 %v772, %v798
        %v821 = vsub.f32 %v773, %v800
        %v822 = vsub.f32 %v774, %v802
        %v823 = vsub.f32 %v775, %v804
        %v824 = vsub.f32 %v776, %v806
        %v825 = vsub.f32 %v777, %v808
        %v826 = vsub.f32 %v778, %v810
        %v827 = vmul.f32 %v811, 1.442695
        %v828 = vpow.pop %v827
        %v829 = vmul.f32 %v812, 1.442695
        %v830 = vpow.pop %v829
        %v831 = vmul.f32 %v813, 1.442695
        %v832 = vpow.pop %v831
        %v833 = vmul.f32 %v814, 1.442695
        %v834 = vpow.pop %v833
        %v835 = vmul.f32 %v815, 1.442695
        %v836 = vpow.pop %v835
        %v837 = vmul.f32 %v816, 1.442695
        %v838 = vpow.pop %v837
        %v839 = vmul.f32 %v817, 1.442695
        %v840 = vpow.pop %v839
        %v841 = vmul.f32 %v818, 1.442695
        %v842 = vpow.pop %v841
        %v843 = vmul.f32 %v819, 1.442695
        %v844 = vpow.pop %v843
        %v845 = vmul.f32 %v820, 1.442695
        %v846 = vpow.pop %v845
        %v847 = vmul.f32 %v821, 1.442695
        %v848 = vpow.pop %v847
        %v849 = vmul.f32 %v822, 1.442695
        %v850 = vpow.pop %v849
        %v851 = vmul.f32 %v823, 1.442695
        %v852 = vpow.pop %v851
        %v853 = vmul.f32 %v824, 1.442695
        %v854 = vpow.pop %v853
        %v855 = vmul.f32 %v825, 1.442695
        %v856 = vpow.pop %v855
        %v857 = vmul.f32 %v826, 1.442695
        %v858 = vpow.pop %v857
        %859 = vadd.xlane.f32.xlu0 %v828
        %v860 = vpop.xlane.xlu0 %859
        %861 = vadd.xlane.f32.xlu0 %v830
        %v862 = vpop.xlane.xlu0 %861
        %863 = vadd.xlane.f32.xlu0 %v832
        %v864 = vpop.xlane.xlu0 %863
        %865 = vadd.xlane.f32.xlu0 %v834
        %v866 = vpop.xlane.xlu0 %865
        %867 = vadd.xlane.f32.xlu0 %v836
        %v868 = vpop.xlane.xlu0 %867
        %869 = vadd.xlane.f32.xlu0 %v838
        %v870 = vpop.xlane.xlu0 %869
        %871 = vadd.xlane.f32.xlu0 %v840
        %v872 = vpop.xlane.xlu0 %871
        %873 = vadd.xlane.f32.xlu0 %v842
        %v874 = vpop.xlane.xlu0 %873
        %875 = vadd.xlane.f32.xlu0 %v844
        %v876 = vpop.xlane.xlu0 %875
        %877 = vadd.xlane.f32.xlu0 %v846
        %v878 = vpop.xlane.xlu0 %877
        %879 = vadd.xlane.f32.xlu0 %v848
        %v880 = vpop.xlane.xlu0 %879
        %881 = vadd.xlane.f32.xlu0 %v850
        %v882 = vpop.xlane.xlu0 %881
        %883 = vadd.xlane.f32.xlu0 %v852
        %v884 = vpop.xlane.xlu0 %883
        %885 = vadd.xlane.f32.xlu0 %v854
        %v886 = vpop.xlane.xlu0 %885
        %887 = vadd.xlane.f32.xlu0 %v856
        %v888 = vpop.xlane.xlu0 %887
        %889 = vadd.xlane.f32.xlu0 %v858
        %v890 = vpop.xlane.xlu0 %889
        %v891 = vrcp.pop %v860
        %v892 = vmul.f32 %v860, %v891
        %v893 = vsub.f32 1.0, %v892
        %v894 = vmul.f32 %v891, %v893
        %v895 = vadd.f32 %v891, %v894
        %vm896 = vweird.f32 %v860
        %vm897 = vweird.f32 %v891
        %vm898 = vmor %vm896, %vm897
        %v899 = vsel %vm898, %v891, %v895
        %v900 = vand.u32 2147483647, %v860
        %vm901 = vcmp.eq.f32.partialorder %v900, 8.507059e+37
        %v902 = vand.u32 %v860, 2147483648
        %v903 = vor.u32 1.1754944e-38, %v902
        %v904 = vsel %vm901, %v903, %v899
        %v905 = vmul.f32 %v828, %v904
        %v906 = vrcp.pop %v862
        %v907 = vmul.f32 %v862, %v906
        %v908 = vsub.f32 1.0, %v907
        %v909 = vmul.f32 %v906, %v908
        %v910 = vadd.f32 %v906, %v909
        %vm911 = vweird.f32 %v862
        %vm912 = vweird.f32 %v906
        %vm913 = vmor %vm911, %vm912
        %v914 = vsel %vm913, %v906, %v910
        %v915 = vand.u32 2147483647, %v862
        %vm916 = vcmp.eq.f32.partialorder %v915, 8.507059e+37
        %v917 = vand.u32 %v862, 2147483648
        %v918 = vor.u32 1.1754944e-38, %v917
        %v919 = vsel %vm916, %v918, %v914
        %v920 = vmul.f32 %v830, %v919
        %v921 = vrcp.pop %v864
        %v922 = vmul.f32 %v864, %v921
        %v923 = vsub.f32 1.0, %v922
        %v924 = vmul.f32 %v921, %v923
        %v925 = vadd.f32 %v921, %v924
        %vm926 = vweird.f32 %v864
        %vm927 = vweird.f32 %v921
        %vm928 = vmor %vm926, %vm927
        %v929 = vsel %vm928, %v921, %v925
        %v930 = vand.u32 2147483647, %v864
        %vm931 = vcmp.eq.f32.partialorder %v930, 8.507059e+37
        %v932 = vand.u32 %v864, 2147483648
        %v933 = vor.u32 1.1754944e-38, %v932
        %v934 = vsel %vm931, %v933, %v929
        %v935 = vmul.f32 %v832, %v934
        %v936 = vrcp.pop %v866
        %v937 = vmul.f32 %v866, %v936
        %v938 = vsub.f32 1.0, %v937
        %v939 = vmul.f32 %v936, %v938
        %v940 = vadd.f32 %v936, %v939
        %vm941 = vweird.f32 %v866
        %vm942 = vweird.f32 %v936
        %vm943 = vmor %vm941, %vm942
        %v944 = vsel %vm943, %v936, %v940
        %v945 = vand.u32 2147483647, %v866
        %vm946 = vcmp.eq.f32.partialorder %v945, 8.507059e+37
        %v947 = vand.u32 %v866, 2147483648
        %v948 = vor.u32 1.1754944e-38, %v947
        %v949 = vsel %vm946, %v948, %v944
        %v950 = vmul.f32 %v834, %v949
        %v951 = vrcp.pop %v868
        %v952 = vmul.f32 %v868, %v951
        %v953 = vsub.f32 1.0, %v952
        %v954 = vmul.f32 %v951, %v953
        %v955 = vadd.f32 %v951, %v954
        %vm956 = vweird.f32 %v868
        %vm957 = vweird.f32 %v951
        %vm958 = vmor %vm956, %vm957
        %v959 = vsel %vm958, %v951, %v955
        %v960 = vand.u32 2147483647, %v868
        %vm961 = vcmp.eq.f32.partialorder %v960, 8.507059e+37
        %v962 = vand.u32 %v868, 2147483648
        %v963 = vor.u32 1.1754944e-38, %v962
        %v964 = vsel %vm961, %v963, %v959
        %v965 = vmul.f32 %v836, %v964
        %v966 = vrcp.pop %v870
        %v967 = vmul.f32 %v870, %v966
        %v968 = vsub.f32 1.0, %v967
        %v969 = vmul.f32 %v966, %v968
        %v970 = vadd.f32 %v966, %v969
        %vm971 = vweird.f32 %v870
        %vm972 = vweird.f32 %v966
        %vm973 = vmor %vm971, %vm972
        %v974 = vsel %vm973, %v966, %v970
        %v975 = vand.u32 2147483647, %v870
        %vm976 = vcmp.eq.f32.partialorder %v975, 8.507059e+37
        %v977 = vand.u32 %v870, 2147483648
        %v978 = vor.u32 1.1754944e-38, %v977
        %v979 = vsel %vm976, %v978, %v974
        %v980 = vmul.f32 %v838, %v979
        %v981 = vrcp.pop %v872
        %v982 = vmul.f32 %v872, %v981
        %v983 = vsub.f32 1.0, %v982
        %v984 = vmul.f32 %v981, %v983
        %v985 = vadd.f32 %v981, %v984
        %vm986 = vweird.f32 %v872
        %vm987 = vweird.f32 %v981
        %vm988 = vmor %vm986, %vm987
        %v989 = vsel %vm988, %v981, %v985
        %v990 = vand.u32 2147483647, %v872
        %vm991 = vcmp.eq.f32.partialorder %v990, 8.507059e+37
        %v992 = vand.u32 %v872, 2147483648
        %v993 = vor.u32 1.1754944e-38, %v992
        %v994 = vsel %vm991, %v993, %v989
        %v995 = vmul.f32 %v840, %v994
        %v996 = vrcp.pop %v874
        %v997 = vmul.f32 %v874, %v996
        %v998 = vsub.f32 1.0, %v997
        %v999 = vmul.f32 %v996, %v998
        %v1000 = vadd.f32 %v996, %v999
        %vm1001 = vweird.f32 %v874
        %vm1002 = vweird.f32 %v996
        %vm1003 = vmor %vm1001, %vm1002
        %v1004 = vsel %vm1003, %v996, %v1000
        %v1005 = vand.u32 2147483647, %v874
        %vm1006 = vcmp.eq.f32.partialorder %v1005, 8.507059e+37
        %v1007 = vand.u32 %v874, 2147483648
        %v1008 = vor.u32 1.1754944e-38, %v1007
        %v1009 = vsel %vm1006, %v1008, %v1004
        %v1010 = vmul.f32 %v842, %v1009
        %v1011 = vrcp.pop %v876
        %v1012 = vmul.f32 %v876, %v1011
        %v1013 = vsub.f32 1.0, %v1012
        %v1014 = vmul.f32 %v1011, %v1013
        %v1015 = vadd.f32 %v1011, %v1014
        %vm1016 = vweird.f32 %v876
        %vm1017 = vweird.f32 %v1011
        %vm1018 = vmor %vm1016, %vm1017
        %v1019 = vsel %vm1018, %v1011, %v1015
        %v1020 = vand.u32 2147483647, %v876
        %vm1021 = vcmp.eq.f32.partialorder %v1020, 8.507059e+37
        %v1022 = vand.u32 %v876, 2147483648
        %v1023 = vor.u32 1.1754944e-38, %v1022
        %v1024 = vsel %vm1021, %v1023, %v1019
        %v1025 = vmul.f32 %v844, %v1024
        %v1026 = vrcp.pop %v878
        %v1027 = vmul.f32 %v878, %v1026
        %v1028 = vsub.f32 1.0, %v1027
        %v1029 = vmul.f32 %v1026, %v1028
        %v1030 = vadd.f32 %v1026, %v1029
        %vm1031 = vweird.f32 %v878
        %vm1032 = vweird.f32 %v1026
        %vm1033 = vmor %vm1031, %vm1032
        %v1034 = vsel %vm1033, %v1026, %v1030
        %v1035 = vand.u32 2147483647, %v878
        %vm1036 = vcmp.eq.f32.partialorder %v1035, 8.507059e+37
        %v1037 = vand.u32 %v878, 2147483648
        %v1038 = vor.u32 1.1754944e-38, %v1037
        %v1039 = vsel %vm1036, %v1038, %v1034
        %v1040 = vmul.f32 %v846, %v1039
        %v1041 = vrcp.pop %v880
        %v1042 = vmul.f32 %v880, %v1041
        %v1043 = vsub.f32 1.0, %v1042
        %v1044 = vmul.f32 %v1041, %v1043
        %v1045 = vadd.f32 %v1041, %v1044
        %vm1046 = vweird.f32 %v880
        %vm1047 = vweird.f32 %v1041
        %vm1048 = vmor %vm1046, %vm1047
        %v1049 = vsel %vm1048, %v1041, %v1045
        %v1050 = vand.u32 2147483647, %v880
        %vm1051 = vcmp.eq.f32.partialorder %v1050, 8.507059e+37
        %v1052 = vand.u32 %v880, 2147483648
        %v1053 = vor.u32 1.1754944e-38, %v1052
        %v1054 = vsel %vm1051, %v1053, %v1049
        %v1055 = vmul.f32 %v848, %v1054
        %v1056 = vrcp.pop %v882
        %v1057 = vmul.f32 %v882, %v1056
        %v1058 = vsub.f32 1.0, %v1057
        %v1059 = vmul.f32 %v1056, %v1058
        %v1060 = vadd.f32 %v1056, %v1059
        %vm1061 = vweird.f32 %v882
        %vm1062 = vweird.f32 %v1056
        %vm1063 = vmor %vm1061, %vm1062
        %v1064 = vsel %vm1063, %v1056, %v1060
        %v1065 = vand.u32 2147483647, %v882
        %vm1066 = vcmp.eq.f32.partialorder %v1065, 8.507059e+37
        %v1067 = vand.u32 %v882, 2147483648
        %v1068 = vor.u32 1.1754944e-38, %v1067
        %v1069 = vsel %vm1066, %v1068, %v1064
        %v1070 = vmul.f32 %v850, %v1069
        %v1071 = vrcp.pop %v884
        %v1072 = vmul.f32 %v884, %v1071
        %v1073 = vsub.f32 1.0, %v1072
        %v1074 = vmul.f32 %v1071, %v1073
        %v1075 = vadd.f32 %v1071, %v1074
        %vm1076 = vweird.f32 %v884
        %vm1077 = vweird.f32 %v1071
        %vm1078 = vmor %vm1076, %vm1077
        %v1079 = vsel %vm1078, %v1071, %v1075
        %v1080 = vand.u32 2147483647, %v884
        %vm1081 = vcmp.eq.f32.partialorder %v1080, 8.507059e+37
        %v1082 = vand.u32 %v884, 2147483648
        %v1083 = vor.u32 1.1754944e-38, %v1082
        %v1084 = vsel %vm1081, %v1083, %v1079
        %v1085 = vmul.f32 %v852, %v1084
        %v1086 = vrcp.pop %v886
        %v1087 = vmul.f32 %v886, %v1086
        %v1088 = vsub.f32 1.0, %v1087
        %v1089 = vmul.f32 %v1086, %v1088
        %v1090 = vadd.f32 %v1086, %v1089
        %vm1091 = vweird.f32 %v886
        %vm1092 = vweird.f32 %v1086
        %vm1093 = vmor %vm1091, %vm1092
        %v1094 = vsel %vm1093, %v1086, %v1090
        %v1095 = vand.u32 2147483647, %v886
        %vm1096 = vcmp.eq.f32.partialorder %v1095, 8.507059e+37
        %v1097 = vand.u32 %v886, 2147483648
        %v1098 = vor.u32 1.1754944e-38, %v1097
        %v1099 = vsel %vm1096, %v1098, %v1094
        %v1100 = vmul.f32 %v854, %v1099
        %v1101 = vrcp.pop %v888
        %v1102 = vmul.f32 %v888, %v1101
        %v1103 = vsub.f32 1.0, %v1102
        %v1104 = vmul.f32 %v1101, %v1103
        %v1105 = vadd.f32 %v1101, %v1104
        %vm1106 = vweird.f32 %v888
        %vm1107 = vweird.f32 %v1101
        %vm1108 = vmor %vm1106, %vm1107
        %v1109 = vsel %vm1108, %v1101, %v1105
        %v1110 = vand.u32 2147483647, %v888
        %vm1111 = vcmp.eq.f32.partialorder %v1110, 8.507059e+37
        %v1112 = vand.u32 %v888, 2147483648
        %v1113 = vor.u32 1.1754944e-38, %v1112
        %v1114 = vsel %vm1111, %v1113, %v1109
        %v1115 = vmul.f32 %v856, %v1114
        %v1116 = vrcp.pop %v890
        %v1117 = vmul.f32 %v890, %v1116
        %v1118 = vsub.f32 1.0, %v1117
        %v1119 = vmul.f32 %v1116, %v1118
        %v1120 = vadd.f32 %v1116, %v1119
        %vm1121 = vweird.f32 %v890
        %vm1122 = vweird.f32 %v1116
        %vm1123 = vmor %vm1121, %vm1122
        %v1124 = vsel %vm1123, %v1116, %v1120
        %v1125 = vand.u32 2147483647, %v890
        %vm1126 = vcmp.eq.f32.partialorder %v1125, 8.507059e+37
        %v1127 = vand.u32 %v890, 2147483648
        %v1128 = vor.u32 1.1754944e-38, %v1127
        %v1129 = vsel %vm1126, %v1128, %v1124
        %v1130 = vmul.f32 %v858, %v1129
        %1131 = vmatpush.msra.mxu0 %v599
        %1132 = vmatpush.msra.mxu0 %v596
        %1133 = vmatpush.msra.mxu0 %v593
        %1134 = vmatpush.msra.mxu0 %v590
        %1135 = vmatpush.msra.mxu0 %v587
        %1136 = vmatpush.msra.mxu0 %v584
        %1137 = vmatpush.msra.mxu0 %v581
        %1138 = vmatpush.msra.mxu0 %v578
        %1139 = vmatpush.msra.mxu0 %v575
        %1140 = vmatpush.msra.mxu0 %v572
        %1141 = vmatpush.msra.mxu0 %v569
        %1142 = vmatpush.msra.mxu0 %v566
        %1143 = vmatpush.msra.mxu0 %v563
        %1144 = vmatpush.msra.mxu0 %v560
        %1145 = vmatpush.msra.mxu0 %v557
        %1146 = vmatpush.msra.mxu0 %v554
        %1147 = vmatmul.f32.gmra.mxu0 %v905
        %v1148 = vpop.f32.mrf.mxu0
        %v1149 = vadd.f32 0.0, %v1148
        %1150 = vmatmul.f32.gmra.mxu0 %v920
        %v1151 = vpop.f32.mrf.mxu0
        %v1152 = vadd.f32 0.0, %v1151
        %1153 = vmatmul.f32.gmra.mxu0 %v935
        %v1154 = vpop.f32.mrf.mxu0
        %v1155 = vadd.f32 0.0, %v1154
        %1156 = vmatmul.f32.gmra.mxu0 %v950
        %v1157 = vpop.f32.mrf.mxu0
        %v1158 = vadd.f32 0.0, %v1157
        %1159 = vmatmul.f32.gmra.mxu0 %v965
        %v1160 = vpop.f32.mrf.mxu0
        %v1161 = vadd.f32 0.0, %v1160
        %1162 = vmatmul.f32.gmra.mxu0 %v980
        %v1163 = vpop.f32.mrf.mxu0
        %v1164 = vadd.f32 0.0, %v1163
        %1165 = vmatmul.f32.gmra.mxu0 %v995
        %v1166 = vpop.f32.mrf.mxu0
        %v1167 = vadd.f32 0.0, %v1166
        %1168 = vmatmul.f32.gmra.mxu0 %v1010
        %v1169 = vpop.f32.mrf.mxu0
        %v1170 = vadd.f32 0.0, %v1169
        %1171 = vmatmul.f32.gmra.mxu0 %v1025
        %v1172 = vpop.f32.mrf.mxu0
        %v1173 = vadd.f32 0.0, %v1172
        %1174 = vmatmul.f32.gmra.mxu0 %v1040
        %v1175 = vpop.f32.mrf.mxu0
        %v1176 = vadd.f32 0.0, %v1175
        %1177 = vmatmul.f32.gmra.mxu0 %v1055
        %v1178 = vpop.f32.mrf.mxu0
        %v1179 = vadd.f32 0.0, %v1178
        %1180 = vmatmul.f32.gmra.mxu0 %v1070
        %v1181 = vpop.f32.mrf.mxu0
        %v1182 = vadd.f32 0.0, %v1181
        %1183 = vmatmul.f32.gmra.mxu0 %v1085
        %v1184 = vpop.f32.mrf.mxu0
        %v1185 = vadd.f32 0.0, %v1184
        %1186 = vmatmul.f32.gmra.mxu0 %v1100
        %v1187 = vpop.f32.mrf.mxu0
        %v1188 = vadd.f32 0.0, %v1187
        %1189 = vmatmul.f32.gmra.mxu0 %v1115
        %v1190 = vpop.f32.mrf.mxu0
        %v1191 = vadd.f32 0.0, %v1190
        %1192 = vmatmul.f32.gmra.mxu0 %v1130
        %v1193 = vpop.f32.mrf.mxu0
        %v1194 = vadd.f32 0.0, %v1193
        %1195 = vdwg.mxu0
        %v1196 = vld [vmem:[%s341] sm:$0xff]
        %v1197 = vld [vmem:[%s341 + $0x8] sm:$0xff]
        %v1199 = vsel %vm601, %v1149, 0
        %v1202 = vsel %vm601, %v1152, 0
        %v1205 = vsel %vm601, %v1155, 0
        %v1208 = vsel %vm601, %v1158, 0
        %v1211 = vsel %vm601, %v1161, 0
        %v1214 = vsel %vm601, %v1164, 0
        %v1217 = vsel %vm601, %v1167, 0
        %v1220 = vsel %vm601, %v1170, 0
        %v1223 = vsel %vm601, %v1173, 0
        %v1226 = vsel %vm601, %v1176, 0
        %v1229 = vsel %vm601, %v1179, 0
        %v1232 = vsel %vm601, %v1182, 0
        %v1235 = vsel %vm601, %v1185, 0
        %v1238 = vsel %vm601, %v1188, 0
        %v1241 = vsel %vm601, %v1191, 0
        %v1244 = vsel %vm601, %v1194, 0
        %1246 = vmatpush.msra.mxu0 0.0
        %1247 = vmatpush.msra.mxu0 0.0
        %1248 = vmatpush.msra.mxu0 0.0
        %1249 = vmatpush.msra.mxu0 0.0
        %1250 = vmatpush.msra.mxu0 0.0
        %1251 = vmatpush.msra.mxu0 0.0
        %1252 = vmatpush.msra.mxu0 0.0
        %1253 = vmatpush.msra.mxu0 0.0
        %1254 = vmatpush.msra.mxu0 0.0
        %1255 = vmatpush.msra.mxu0 0.0
        %1256 = vmatpush.msra.mxu0 0.0
        %1257 = vmatpush.msra.mxu0 0.0
        %1258 = vmatpush.msra.mxu0 0.0
        %1259 = vmatpush.msra.mxu0 0.0
        %1260 = vmatpush.msra.mxu0 %v1197
        %1261 = vmatpush.msra.mxu0 %v1196
        %1262 = vmatmul.f32.gmra.mxu0 %v1199
        %v1263 = vpop.f32.mrf.mxu0
        %v1264 = vadd.f32 0.0, %v1263
        %1265 = vmatmul.f32.gmra.mxu0 %v1202
        %v1266 = vpop.f32.mrf.mxu0
        %v1267 = vadd.f32 0.0, %v1266
        %1268 = vmatmul.f32.gmra.mxu0 %v1205
        %v1269 = vpop.f32.mrf.mxu0
        %v1270 = vadd.f32 0.0, %v1269
        %1271 = vmatmul.f32.gmra.mxu0 %v1208
        %v1272 = vpop.f32.mrf.mxu0
        %v1273 = vadd.f32 0.0, %v1272
        %1274 = vmatmul.f32.gmra.mxu0 %v1211
        %v1275 = vpop.f32.mrf.mxu0
        %v1276 = vadd.f32 0.0, %v1275
        %1277 = vmatmul.f32.gmra.mxu0 %v1214
        %v1278 = vpop.f32.mrf.mxu0
        %v1279 = vadd.f32 0.0, %v1278
        %1280 = vmatmul.f32.gmra.mxu0 %v1217
        %v1281 = vpop.f32.mrf.mxu0
        %v1282 = vadd.f32 0.0, %v1281
        %1283 = vmatmul.f32.gmra.mxu0 %v1220
        %v1284 = vpop.f32.mrf.mxu0
        %v1285 = vadd.f32 0.0, %v1284
        %1286 = vmatmul.f32.gmra.mxu0 %v1223
        %v1287 = vpop.f32.mrf.mxu0
        %v1288 = vadd.f32 0.0, %v1287
        %1289 = vmatmul.f32.gmra.mxu0 %v1226
        %v1290 = vpop.f32.mrf.mxu0
        %v1291 = vadd.f32 0.0, %v1290
        %1292 = vmatmul.f32.gmra.mxu0 %v1229
        %v1293 = vpop.f32.mrf.mxu0
        %v1294 = vadd.f32 0.0, %v1293
        %1295 = vmatmul.f32.gmra.mxu0 %v1232
        %v1296 = vpop.f32.mrf.mxu0
        %v1297 = vadd.f32 0.0, %v1296
        %1298 = vmatmul.f32.gmra.mxu0 %v1235
        %v1299 = vpop.f32.mrf.mxu0
        %v1300 = vadd.f32 0.0, %v1299
        %1301 = vmatmul.f32.gmra.mxu0 %v1238
        %v1302 = vpop.f32.mrf.mxu0
        %v1303 = vadd.f32 0.0, %v1302
        %1304 = vmatmul.f32.gmra.mxu0 %v1241
        %v1305 = vpop.f32.mrf.mxu0
        %v1306 = vadd.f32 0.0, %v1305
        %1307 = vmatmul.f32.gmra.mxu0 %v1244
        %v1308 = vpop.f32.mrf.mxu0
        %v1309 = vadd.f32 0.0, %v1308
        %1310 = vdwg.mxu0
        %p1311 = scmp.eq.s32.totalorder %s25, 0
        // Predicated region
        $region45: #{tpu_custom_call.1} parent=43 // pred_check
          %p1312 = pneg %p1311
        $region46: #{tpu_custom_call.1} parent=43 // pred_check_branch
          %1314 = sbr.rel (%p1312) target = $region48
        $region47: #{tpu_custom_call.1} parent=43 // pred_region
          %v1315 = vld [vmem:[%s5] sm:$0x1]
          %v1317 = vperm.slane %v1315, 0
          %v1319 = vadd.f32 %v1264, %v1317
          %v1320 = vadd.f32 %v1267, %v1317
          %v1321 = vadd.f32 %v1270, %v1317
          %v1322 = vadd.f32 %v1273, %v1317
          %v1323 = vadd.f32 %v1276, %v1317
          %v1324 = vadd.f32 %v1279, %v1317
          %v1325 = vadd.f32 %v1282, %v1317
          %v1326 = vadd.f32 %v1285, %v1317
          %v1327 = vadd.f32 %v1288, %v1317
          %v1328 = vadd.f32 %v1291, %v1317
          %v1329 = vadd.f32 %v1294, %v1317
          %v1330 = vadd.f32 %v1297, %v1317
          %v1331 = vadd.f32 %v1300, %v1317
          %v1332 = vadd.f32 %v1303, %v1317
          %v1333 = vadd.f32 %v1306, %v1317
          %v1334 = vadd.f32 %v1309, %v1317
          %1335 = vst [vmem:[%s316] sm:$0xff] %v1319
          %1336 = vst [vmem:[%s316 + $0x8] sm:$0xff] %v1320
          %1337 = vst [vmem:[%s316 + $0x10] sm:$0xff] %v1321
          %1338 = vst [vmem:[%s316 + $0x18] sm:$0xff] %v1322
          %1339 = vst [vmem:[%s316 + $0x20] sm:$0xff] %v1323
          %1340 = vst [vmem:[%s316 + $0x28] sm:$0xff] %v1324
          %1341 = vst [vmem:[%s316 + $0x30] sm:$0xff] %v1325
          %1342 = vst [vmem:[%s316 + $0x38] sm:$0xff] %v1326
          %1343 = vst [vmem:[%s316 + $0x40] sm:$0xff] %v1327
          %1344 = vst [vmem:[%s316 + $0x48] sm:$0xff] %v1328
          %1345 = vst [vmem:[%s316 + $0x50] sm:$0xff] %v1329
          %1346 = vst [vmem:[%s316 + $0x58] sm:$0xff] %v1330
          %1347 = vst [vmem:[%s316 + $0x60] sm:$0xff] %v1331
          %1348 = vst [vmem:[%s316 + $0x68] sm:$0xff] %v1332
          %1349 = vst [vmem:[%s316 + $0x70] sm:$0xff] %v1333
          %1350 = vst [vmem:[%s316 + $0x78] sm:$0xff] %v1334
        $region48: #{tpu_custom_call.1} parent=43 // pred_fallthru
          _
        %p1351 = scmp.gt.s32.totalorder %s25, 0
        // Predicated region
        $region49: #{tpu_custom_call.1} parent=43 // pred_check
          %p1352 = pneg %p1351
        $region50: #{tpu_custom_call.1} parent=43 // pred_check_branch
          %1354 = sbr.rel (%p1352) target = $region52
        $region51: #{tpu_custom_call.1} parent=43 // pred_region
          %v1355 = vld [vmem:[%s316] sm:$0xff]
          %v1356 = vld [vmem:[%s316 + $0x8] sm:$0xff]
          %v1357 = vld [vmem:[%s316 + $0x10] sm:$0xff]
          %v1358 = vld [vmem:[%s316 + $0x18] sm:$0xff]
          %v1359 = vld [vmem:[%s316 + $0x20] sm:$0xff]
          %v1360 = vld [vmem:[%s316 + $0x28] sm:$0xff]
          %v1361 = vld [vmem:[%s316 + $0x30] sm:$0xff]
          %v1362 = vld [vmem:[%s316 + $0x38] sm:$0xff]
          %v1363 = vld [vmem:[%s316 + $0x40] sm:$0xff]
          %v1364 = vld [vmem:[%s316 + $0x48] sm:$0xff]
          %v1365 = vld [vmem:[%s316 + $0x50] sm:$0xff]
          %v1366 = vld [vmem:[%s316 + $0x58] sm:$0xff]
          %v1367 = vld [vmem:[%s316 + $0x60] sm:$0xff]
          %v1368 = vld [vmem:[%s316 + $0x68] sm:$0xff]
          %v1369 = vld [vmem:[%s316 + $0x70] sm:$0xff]
          %v1370 = vld [vmem:[%s316 + $0x78] sm:$0xff]
          %v1371 = vadd.f32 %v1355, %v1264
          %v1372 = vadd.f32 %v1356, %v1267
          %v1373 = vadd.f32 %v1357, %v1270
          %v1374 = vadd.f32 %v1358, %v1273
          %v1375 = vadd.f32 %v1359, %v1276
          %v1376 = vadd.f32 %v1360, %v1279
          %v1377 = vadd.f32 %v1361, %v1282
          %v1378 = vadd.f32 %v1362, %v1285
          %v1379 = vadd.f32 %v1363, %v1288
          %v1380 = vadd.f32 %v1364, %v1291
          %v1381 = vadd.f32 %v1365, %v1294
          %v1382 = vadd.f32 %v1366, %v1297
          %v1383 = vadd.f32 %v1367, %v1300
          %v1384 = vadd.f32 %v1368, %v1303
          %v1385 = vadd.f32 %v1369, %v1306
          %v1386 = vadd.f32 %v1370, %v1309
          %1387 = vst [vmem:[%s316] sm:$0xff] %v1371
          %1388 = vst [vmem:[%s316 + $0x8] sm:$0xff] %v1372
          %1389 = vst [vmem:[%s316 + $0x10] sm:$0xff] %v1373
          %1390 = vst [vmem:[%s316 + $0x18] sm:$0xff] %v1374
          %1391 = vst [vmem:[%s316 + $0x20] sm:$0xff] %v1375
          %1392 = vst [vmem:[%s316 + $0x28] sm:$0xff] %v1376
          %1393 = vst [vmem:[%s316 + $0x30] sm:$0xff] %v1377
          %1394 = vst [vmem:[%s316 + $0x38] sm:$0xff] %v1378
          %1395 = vst [vmem:[%s316 + $0x40] sm:$0xff] %v1379
          %1396 = vst [vmem:[%s316 + $0x48] sm:$0xff] %v1380
          %1397 = vst [vmem:[%s316 + $0x50] sm:$0xff] %v1381
          %1398 = vst [vmem:[%s316 + $0x58] sm:$0xff] %v1382
          %1399 = vst [vmem:[%s316 + $0x60] sm:$0xff] %v1383
          %1400 = vst [vmem:[%s316 + $0x68] sm:$0xff] %v1384
          %1401 = vst [vmem:[%s316 + $0x70] sm:$0xff] %v1385
          %1402 = vst [vmem:[%s316 + $0x78] sm:$0xff] %v1386
        $region52: #{tpu_custom_call.1} parent=43 // pred_fallthru
          _
        %s1403 = sand.u32 %s191, 1
        %s1404 = scalar_lea.sflag [#allocation3], %s1403
        %s1405 = sand.u32 %s191, 1
        %s1406 = smul.addr %s1405, 128
        %s1407 = scalar_lea.vmem [#allocation2], %s1406
        // Predicated region
        $region53: #{tpu_custom_call.1} parent=43 // pred_check
          %p1408 = pneg %p201
        $region54: #{tpu_custom_call.1} parent=43 // pred_check_branch
          %1410 = sbr.rel (%p1408) target = $region56
        $region55: #{tpu_custom_call.1} parent=43 // pred_region
          %1412 = vsyncadd %s1404, 0
          %s1413 = smul.addr %s24, 16
          %s1414 = smul.addr %s1413, 8
          %s1415 = scalar_lea.hbm %s6, %s1414
          %s1416 = sshll.u32 %s1407, 4
          %s1417 = int_to_ptr.vmem [resolvable:$true] %s1416
          %s1418 = sshll.u32 %s1415, 4
          %s1419 = int_to_ptr.hbm [resolvable:$true] %s1418
          %1424 = dma.vmem_to_hbm [thread:$0]  %s1417, 2048, %s1419, %s1404, 128, 128, 8
        $region56: #{tpu_custom_call.1} parent=43 // pred_fallthru
          _
      $region44: #{tpu_custom_call.1} parent=5 // pred_fallthru
        _
      %p1425 = scmp.le.s32.totalorder 2, %s15
      // Predicated region
      $region57: #{tpu_custom_call.1} parent=5 // pred_check
        %p1426 = pneg %p1425
      $region58: #{tpu_custom_call.1} parent=5 // pred_check_branch
        %1428 = sbr.rel (%p1426) target = $region60
      $region59: #{tpu_custom_call.1} parent=5 // pred_region
        %s1429 = ssub.s32 %s15, 2
        // Predicated region
        $region61: #{tpu_custom_call.1} parent=59 // pred_check
          %p1430 = pneg %p207
        $region62: #{tpu_custom_call.1} parent=59 // pred_check_branch
          %1432 = sbr.rel (%p1430) target = $region64
        $region63: #{tpu_custom_call.1} parent=59 // pred_region
          %s1433 = sand.u32 %s192, 1
          %s1434 = scalar_lea.sflag [#allocation3], %s1433
          %s1435 = sand.u32 %s192, 1
          %s1436 = smul.addr %s1435, 128
          %s1437 = scalar_lea.vmem [#allocation2], %s1436
          %1439 = dma.done %s1434, 2048
        $region64: #{tpu_custom_call.1} parent=59 // pred_fallthru
          _
      $region60: #{tpu_custom_call.1} parent=5 // pred_fallthru
        _
    $region6: #{tpu_custom_call.1} parent=1 // loop_footer
      %s19 = sadd.s32 1, %s15
    $region7: #{tpu_custom_call.1} parent=1 // loop_footer_branch
      %14 = sbr.rel target = $region3
    $region8: #{tpu_custom_call.1} parent=1 // loop_exit
      _
    %1440 = vsyncpa [#allocation3], 1
    %s1441 = scalar_lea.sflag [#allocation3], 1
    %1442 = vsyncpa %s1441, 1

</llo_original>
